<compile_context>
chip_gen: v7x
topology: tpu7x:2x2x1
jax: 0.10.0
libtpu: 0.0.40
codegen_flags: <defaults>
</compile_context>

<pallas_src>
import math

import jax
import jax.numpy as jnp
from jax.experimental import pallas as pl
from jax.experimental.pallas import tpu as pltpu


def _broadcast_param_kernel(p_ref, o_ref):
    # p_ref: (1, W) VMEM tile holding the (possibly lane-folded) parameter row.
    # o_ref: (row_tile, W) output tile.  The broadcast refill is a handful of
    # vreg moves and is hidden under the output DMA.
    o_ref[...] = jnp.broadcast_to(p_ref[...], o_ref.shape)


def _round_up(x, m):
    return ((x + m - 1) // m) * m


def _sublane_multiple(dtype):
    # Packed sublane count: 8 for 4-byte, 16 for 2-byte, 32 for 1-byte dtypes.
    itemsize = jnp.dtype(dtype).itemsize
    return max(8, 32 // max(1, itemsize))


def _vmem_capacity_bytes():
    # Generation-aware VMEM query; conservative fallback (v7x per-TC = 64 MiB).
    try:
        cap = int(pltpu.get_tpu_info().vmem_capacity_bytes)
        if cap >= (16 << 20):
            return cap
    except Exception:
        pass
    return 64 * 1024 * 1024


def _pick_row_tile(rows, width, dtype, target_tile_bytes, vmem_capacity_bytes):
    """Largest sublane-aligned row tile such that two double-buffered output
    tiles (plus slack) fit comfortably in VMEM, capped so the grid has at
    least two steps when possible (v7x megacore)."""
    itemsize = jnp.dtype(dtype).itemsize
    sub = _sublane_multiple(dtype)
    bytes_per_row = max(1, width * itemsize)
    # Per-tile byte budget: requested target, but never more than ~35% of the
    # chip's VMEM (two double-buffered tiles -> ~70%, leaving headroom for the
    # param block and compiler scratch).
    budget = min(int(target_tile_bytes), int(0.7 * vmem_capacity_bytes) // 2)
    budget = max(budget, sub * bytes_per_row)
    tile = max(sub, (budget // bytes_per_row) // sub * sub)
    tile = min(tile, _round_up(rows, sub))                      # not bigger than the array
    tile = min(tile, max(sub, _round_up(-(-rows // 2), sub)))   # >=2 grid steps if possible
    return int(tile)


def _lane_fold_factor(rows, dim):
    """Smallest k with (k*dim) % 128 == 0 and rows % k == 0 (else 1)."""
    if dim % 128 == 0:
        return 1
    k = 128 // math.gcd(dim, 128)
    return k if (k > 1 and rows % k == 0) else 1


def model_parameter_forward(context_output, param, *, target_tile_bytes=12 << 20):
    """Pallas equivalent of the learned-parameter broadcast.

    context_output: array of shape (..., H)  (values unused, only shape matters)
    param:          array of shape (dim,)
    returns:        array of shape context_output.shape[:-1] + (dim,)
    """
    dim = int(param.shape[0])
    repeat_shape = tuple(int(r) for r in context_output.shape[:-1])
    rows = 1
    for r in repeat_shape:
        rows *= r

    if rows == 0 or dim == 0:
        return jnp.zeros(repeat_shape + (dim,), dtype=param.dtype)

    # Lane-width folding: present a lane-dense (multiple-of-128) output slab
    # whenever possible so the stores are unmasked vst (layout plumbing only).
    k = _lane_fold_factor(rows, dim)
    width = k * dim
    rows_f = rows // k
    p_row = jnp.tile(param, k).reshape(1, width) if k > 1 else param.reshape(1, dim)

    itemsize = jnp.dtype(param.dtype).itemsize
    vmem_cap = _vmem_capacity_bytes()
    tile = _pick_row_tile(rows_f, width, param.dtype, target_tile_bytes, vmem_cap)
    grid = (pl.cdiv(rows_f, tile),)

    # Wire the VMEM budget into the compiler: two double-buffered output tiles
    # + double-buffered param block + 1 MiB slack, kept under physical VMEM.
    tile_bytes = tile * width * itemsize
    vmem_limit = 2 * tile_bytes + 2 * width * itemsize + (1 << 20)
    vmem_limit = int(min(max(vmem_limit, 16 << 20),
                         max(vmem_cap - (4 << 20), 16 << 20)))

    out_flat = pl.pallas_call(
        _broadcast_param_kernel,
        out_shape=jax.ShapeDtypeStruct((rows_f, width), param.dtype),
        grid_spec=pltpu.PrefetchScalarGridSpec(
            num_scalar_prefetch=0,
            grid=grid,
            # Constant index_map -> the (1, width) param block is fetched once.
            in_specs=[pl.BlockSpec((1, width), lambda i: (0, 0))],
            out_specs=pl.BlockSpec((tile, width), lambda i: (i, 0)),
        ),
        compiler_params=pltpu.CompilerParams(
            dimension_semantics=("parallel",),
            vmem_limit_bytes=vmem_limit),
    )(p_row)

    # Row-major contiguous: this reshape (including the un-fold) is metadata-only.
    return out_flat.reshape(repeat_shape + (dim,))


if __name__ == "__main__":
    key = jax.random.PRNGKey(0)

    # Small shapes consistent with a BERT-ish context_output: (B, S, H)
    B, S, H = 2, 8, 32
    k1, k2, k3 = jax.random.split(key, 3)
    context_output = jax.random.normal(k1, (B, S, H), dtype=jnp.float32)

    # Case 1: lane-dense parameter (dim multiple of 128).
    dim = 128
    param = jax.random.normal(k2, (dim,), dtype=jnp.float32)
    out = jax.block_until_ready(model_parameter_forward(context_output, param))
    ref = jnp.broadcast_to(param, (B, S, dim))
    assert out.shape == (B, S, dim), out.shape
    assert jnp.allclose(out, ref), "mismatch vs reference broadcast (dim=128)"

    # Case 2: narrow parameter (dim=64) exercising the lane-fold path.
    dim2 = 64
    param2 = jax.random.normal(k3, (dim2,), dtype=jnp.float32)
    out2 = jax.block_until_ready(model_parameter_forward(context_output, param2))
    ref2 = jnp.broadcast_to(param2, (B, S, dim2))
    assert out2.shape == (B, S, dim2), out2.shape
    assert jnp.allclose(out2, ref2), "mismatch vs reference broadcast (dim=64)"

    print("KERNEL_OK")
</pallas_src>

<mosaic_0001>
module attributes {stable_mosaic.version = 11 : i64} {
  func.func @_broadcast_param_kernel(%arg0: i32, %arg1: memref<1x128xf32, #tpu.memory_space<vmem>>, %arg2: memref<8x128xf32, #tpu.memory_space<vmem>>) attributes {dimension_semantics = [#tpu.dimension_semantics<parallel>], iteration_bounds = array<i64: 2>, scalar_prefetch = 0 : i64, scratch_operands = 0 : i64, tpu.core_type = #tpu.core_type<tc>, window_params = [{pipeline_mode = #tpu.pipeline_mode<synchronous>, transform_indices = @transform_0, window_bounds = array<i64: 1, 128>}, {transform_indices = @transform_1, window_bounds = array<i64: 8, 128>}]} {
    %c0 = arith.constant 0 : index
    %c0_0 = arith.constant 0 : index
    %0 = vector.load %arg1[%c0, %c0_0] : memref<1x128xf32, #tpu.memory_space<vmem>>, vector<1x128xf32>
    %1 = vector.shape_cast %0 : vector<1x128xf32> to vector<1x128xf32>
    %2 = vector.broadcast %1 : vector<1x128xf32> to vector<8x128xf32>
    %c0_1 = arith.constant 0 : index
    %c0_2 = arith.constant 0 : index
    %3 = vector.load %arg2[%c0_1, %c0_2] : memref<8x128xf32, #tpu.memory_space<vmem>>, vector<8x128xf32>
    tpu.vector_store %arg2[%c0_1, %c0_2], %2 {strides = array<i32>} : memref<8x128xf32, #tpu.memory_space<vmem>>, vector<8x128xf32>,
    return
  }
  func.func @transform_0(%arg0: i32) -> (i32, i32) {
    %c0_i32 = arith.constant 0 : i32
    %c0_i32_0 = arith.constant 0 : i32
    %c0_i32_1 = arith.constant 0 : i32
    return %c0_i32, %c0_i32_0 : i32, i32
  }
  func.func @transform_1(%arg0: i32) -> (i32, i32) {
    %c0_i32 = arith.constant 0 : i32
    %c0_i32_0 = arith.constant 0 : i32
    return %arg0, %c0_i32 : i32, i32
  }
}

</mosaic_0001>

<llo_original>
// kernel: tpu_custom_call.1
$region0: #{tpu_custom_call.1}
  #allocation0 [shape = 'u32[]', space=smem, size = 0x4, offset = 0x4, fixed_abs, tag = 'smem constant byte address 0x4 - core index']
  #allocation1 [shape = 'u32[144,128]{1,0:T(1,128)}', space=vmem, size = 0x12000, scoped, tag = 'internal scratch']
  %s0 = inlined_call_operand.hbm [shape: f32[1,128], index: 0, kind: input, shape index: {}]
  %s1 = inlined_call_operand.hbm [shape: f32[16,128], index: 1, kind: output, shape index: {}]
  %s2 = sld [smem:[#allocation0]]
  $region41: #{tpu_custom_call.1} parent=0
    _
  %s4 = ssub.s32 1, %s2
  %s5 = scalar_select 0, %s4, %s2
  $region1: #{tpu_custom_call.1} parent=0
    #allocation2 [shape = 'u8[512]{0}', space=vmem, size = 0x400, scoped, tag = 'input window, operand 0, single buffered']
    #allocation3 [shape = 's32[2]{0}', space=sflag, size = 0x8, scoped, tag = 'scoped memory for tpu_custom_call.1']
    #allocation4 [shape = 's32[2]{0}', space=sflag, size = 0x8, scoped, tag = 'scoped memory for tpu_custom_call.1']
    #allocation5 [shape = 'u8[8192]{0}', space=vmem, size = 0x2000, scoped, tag = 'output window, operand 0']
    %6 = vsyncpa [#allocation3], 0
    %7 = vsyncpa [#allocation4], 0
    %s8 = scalar_lea.sflag [#allocation4], 1
    %9 = vsyncpa %s8, 0
    loop: start=0, step=1, limit=4
    $region2: #{tpu_custom_call.1} parent=1 // loop_pre_header
      _
    $region3: #{tpu_custom_call.1} parent=1 // loop_header
      %s11 = sphi 0, %s15
      %p12 = scmp.ge.s32.totalorder %s11, 4
      %s19 = sphi 0, %s19
      %s21 = sphi 0, %s19
      %s22 = sphi 0, %s21
      %s36 = sphi 0, %s22
      %s42 = sphi 0, %s44
      %s45 = sphi 0, %s42
      %s46 = sphi 0, %s45
      %s62 = sphi 0, %s46
    $region4: #{tpu_custom_call.1} parent=1 // loop_header_branch
      %14 = sbr.rel (%p12) target = $region8
    $region5: #{tpu_custom_call.1} parent=1 // loop_body
      %s16 = ssub.s32 %s11, 1
      %s17 = ssub.s32 %s11, 2
      %s18 = sadd.s32 %s11, 1
      %s20 = sadd.s32 %s19, 1
      %p23 = scmp.eq.s32.totalorder %s11, 1
      %p24 = scmp.ne.s32.totalorder %s19, %s21
      %p25 = scmp.eq.s32.totalorder %s11, 0
      %p26 = por %p24, %p25
      %p27 = scmp.ne.s32.totalorder %s19, %s21
      %p28 = scmp.eq.s32.totalorder %s16, 1
      %p29 = por %p27, %p28
      %p30 = scmp.ne.s32.totalorder %s21, %s22
      %p31 = scmp.eq.s32.totalorder %s16, 0
      %p32 = por %p30, %p31
      %p33 = scmp.ne.s32.totalorder %s21, %s22
      %p34 = scmp.eq.s32.totalorder %s17, 1
      %p35 = por %p33, %p34
      %p37 = scmp.ne.s32.totalorder %s22, %s36
      %p38 = scmp.eq.s32.totalorder %s17, 0
      %p39 = por %p37, %p38
      %s40 = ssub.s32 %s11, %s18
      %p41 = scmp.eq.s32.totalorder %s40, 0
      %s43 = sadd.s32 %s42, 1
      %s44 = scalar_select %p41, %s42, %s43
      %p47 = pneg %p41
      %p48 = scmp.eq.s32.totalorder %s11, 1
      %p49 = por %p47, %p48
      %p50 = scmp.ne.s32.totalorder %s42, %s45
      %p51 = scmp.eq.s32.totalorder %s11, 0
      %p52 = por %p50, %p51
      %p53 = scmp.ne.s32.totalorder %s42, %s45
      %p54 = scmp.eq.s32.totalorder %s16, 1
      %p55 = por %p53, %p54
      %p56 = scmp.ne.s32.totalorder %s45, %s46
      %p57 = scmp.eq.s32.totalorder %s16, 0
      %p58 = por %p56, %p57
      %p59 = scmp.ne.s32.totalorder %s45, %s46
      %p60 = scmp.eq.s32.totalorder %s17, 1
      %p61 = por %p59, %p60
      %p63 = scmp.ne.s32.totalorder %s46, %s62
      %p64 = scmp.eq.s32.totalorder %s17, 0
      %p65 = por %p63, %p64
      %p66 = scmp.le.s32.totalorder 1, %s11
      %p67 = scmp.lt.s32.totalorder %s11, 3
      %p68 = pnand %p66, %p67
      %p69 = pneg %p68
      // Predicated region
      $region9: #{tpu_custom_call.1} parent=5 // pred_check
        _
      $region10: #{tpu_custom_call.1} parent=5 // pred_check_branch
        %71 = sbr.rel (%p68) target = $region12
      $region11: #{tpu_custom_call.1} parent=5 // pred_region
        %s72 = ssub.s32 %s11, 1
        // Predicated region
        $region13: #{tpu_custom_call.1} parent=11 // pred_check
          %p73 = pneg %p32
        $region14: #{tpu_custom_call.1} parent=11 // pred_check_branch
          %75 = sbr.rel (%p73) target = $region16
        $region15: #{tpu_custom_call.1} parent=11 // pred_region
          %s77 = ssub.s32 16, 16
          %78 = vsyncadd [#allocation3], %s77
          %s80 = sshll.u32 [#allocation2], 4
          %s81 = int_to_ptr.vmem [resolvable:$true] %s80
          %83 = dma.hbm_to_vmem [thread:$0]  %s0, 16, %s81, [#allocation3]
        $region16: #{tpu_custom_call.1} parent=11 // pred_fallthru
          _
      $region12: #{tpu_custom_call.1} parent=5 // pred_fallthru
        _
      %p84 = scmp.lt.s32.totalorder %s11, 2
      // Predicated region
      $region17: #{tpu_custom_call.1} parent=5 // pred_check
        %p85 = pneg %p84
      $region18: #{tpu_custom_call.1} parent=5 // pred_check_branch
        %87 = sbr.rel (%p85) target = $region20
      $region19: #{tpu_custom_call.1} parent=5 // pred_region
        _
      $region20: #{tpu_custom_call.1} parent=5 // pred_fallthru
        _
      %p88 = scmp.le.s32.totalorder 1, %s11
      %p89 = scmp.lt.s32.totalorder %s11, 3
      %p90 = pnand %p88, %p89
      %p91 = pneg %p90
      // Predicated region
      $region21: #{tpu_custom_call.1} parent=5 // pred_check
        _
      $region22: #{tpu_custom_call.1} parent=5 // pred_check_branch
        %93 = sbr.rel (%p90) target = $region24
      $region23: #{tpu_custom_call.1} parent=5 // pred_region
        %s94 = ssub.s32 %s11, 1
        // Predicated region
        $region25: #{tpu_custom_call.1} parent=23 // pred_check
          %p95 = pneg %p32
        $region26: #{tpu_custom_call.1} parent=23 // pred_check_branch
          %97 = sbr.rel (%p95) target = $region28
        $region27: #{tpu_custom_call.1} parent=23 // pred_region
          %98 = dma.done [#allocation3], 16
        $region28: #{tpu_custom_call.1} parent=23 // pred_fallthru
          _
        %p99 = pneg %p32
        %p100 = pneg %p29
        %p101 = pneg %p58
        %p102 = pneg %p55
        %s103 = sand.u32 %s45, 1
        %s104 = scalar_lea.sflag [#allocation4], %s103
        %s105 = sand.u32 %s45, 1
        %s106 = smul.addr %s105, 8
        %s107 = scalar_lea.vmem [#allocation5], %s106
        %v108 = vld [vmem:[#allocation2] sm:$0x1]
        %v110 = vlaneseq
        %v111 = vshrl.u32 %v110, 7
        %v112 = vsub.s32 0, %v111
        %v113 = vrot.slane %v108, %v112
        %115 = vst [vmem:[%s107] sm:$0xff] %v113
        %s116 = sand.u32 %s45, 1
        %s117 = scalar_lea.sflag [#allocation4], %s116
        %s118 = sand.u32 %s45, 1
        %s119 = smul.addr %s118, 8
        %s120 = scalar_lea.vmem [#allocation5], %s119
        // Predicated region
        $region29: #{tpu_custom_call.1} parent=23 // pred_check
          %p121 = pneg %p55
        $region30: #{tpu_custom_call.1} parent=23 // pred_check_branch
          %123 = sbr.rel (%p121) target = $region32
        $region31: #{tpu_custom_call.1} parent=23 // pred_region
          %s125 = ssub.s32 128, 128
          %126 = vsyncadd %s117, %s125
          %s127 = smul.addr %s16, 128
          %s128 = scalar_lea.hbm %s1, %s127
          %s130 = sshll.u32 %s120, 4
          %s131 = int_to_ptr.vmem [resolvable:$true] %s130
          %133 = dma.vmem_to_hbm [thread:$0]  %s131, 128, %s128, %s117
        $region32: #{tpu_custom_call.1} parent=23 // pred_fallthru
          _
      $region24: #{tpu_custom_call.1} parent=5 // pred_fallthru
        _
      %p134 = scmp.le.s32.totalorder 2, %s11
      // Predicated region
      $region33: #{tpu_custom_call.1} parent=5 // pred_check
        %p135 = pneg %p134
      $region34: #{tpu_custom_call.1} parent=5 // pred_check_branch
        %137 = sbr.rel (%p135) target = $region36
      $region35: #{tpu_custom_call.1} parent=5 // pred_region
        %s138 = ssub.s32 %s11, 2
        // Predicated region
        $region37: #{tpu_custom_call.1} parent=35 // pred_check
          %p139 = pneg %p61
        $region38: #{tpu_custom_call.1} parent=35 // pred_check_branch
          %141 = sbr.rel (%p139) target = $region40
        $region39: #{tpu_custom_call.1} parent=35 // pred_region
          %s142 = sand.u32 %s46, 1
          %s143 = scalar_lea.sflag [#allocation4], %s142
          %s144 = sand.u32 %s46, 1
          %s145 = smul.addr %s144, 8
          %s146 = scalar_lea.vmem [#allocation5], %s145
          %147 = dma.done %s143, 128
        $region40: #{tpu_custom_call.1} parent=35 // pred_fallthru
          _
      $region36: #{tpu_custom_call.1} parent=5 // pred_fallthru
        _
    $region6: #{tpu_custom_call.1} parent=1 // loop_footer
      %s15 = sadd.s32 1, %s11
    $region7: #{tpu_custom_call.1} parent=1 // loop_footer_branch
      %10 = sbr.rel target = $region3
    $region8: #{tpu_custom_call.1} parent=1 // loop_exit
      _
    %148 = vsyncpa [#allocation3], 1
    %s149 = scalar_lea.sflag [#allocation3], 1
    %150 = vsyncpa %s149, 1
    %151 = vsyncpa [#allocation4], 1
    %s152 = scalar_lea.sflag [#allocation4], 1
    %153 = vsyncpa %s152, 1

</llo_original>
